<compile_context>
chip_gen: v7x
topology: tpu7x:2x2x1
jax: 0.10.0
libtpu: 0.0.40
codegen_flags: <defaults>
</compile_context>

<pallas_src>
import functools

import jax
import jax.numpy as jnp
from jax.experimental import pallas as pl
from jax.experimental.pallas import tpu as pltpu

block_size = 8   # max sequence length (tril buffer size in the PyTorch module)
n_embd = 32
LANE = 128       # TPU lane width


def _self_attention_kernel(x_ref, w_ref, o_ref):
    # x_ref: (1, T, C)    f32 VMEM  -- one batch element per grid step
    # w_ref: (C, 3*HP)    f32 VMEM  -- fused [Wk_pad | Wq_pad | Wv_pad], HP = 128-multiple
    # o_ref: (1, T, HP)   f32 VMEM  -- lane-dense output block
    x = x_ref[0]                       # (T, C)
    w = w_ref[...]                     # (C, 3*HP)
    T, C = x.shape
    HP = w.shape[1] // 3

    # Fused projection: one MXU push for k, q, v together.
    kqv = jnp.dot(x, w, preferred_element_type=jnp.float32)          # (T, 3*HP)
    k = kqv[:, 0 * HP:1 * HP]                                        # (T, HP)
    q = kqv[:, 1 * HP:2 * HP] * (C ** -0.5)                          # scale folded into q
    v = kqv[:, 2 * HP:3 * HP]                                        # (T, HP)

    # Scores: contract the lane axis of both operands directly (no k.T relayout).
    # Padded lanes (>= head_size) are zero in both q and k -> contribute nothing.
    s = jax.lax.dot_general(q, k, (((1,), (1,)), ((), ())),
                            preferred_element_type=jnp.float32)      # (T, T)

    # Causal mask (per-batch, so just col <= row; diagonal always unmasked ->
    # every row's softmax denominator is >= 1, no NaN risk).
    row = jax.lax.broadcasted_iota(jnp.int32, (T, T), 0)
    col = jax.lax.broadcasted_iota(jnp.int32, (T, T), 1)
    s = jnp.where(col <= row, s, -jnp.inf)

    # Numerically stable softmax; 1/denom folded into the (T, HP) output and
    # computed with the exact path (it is only (T, 1) values).
    m = jnp.max(s, axis=-1, keepdims=True)
    p = jnp.exp(s - m)                                               # (T, T)
    denom = jnp.sum(p, axis=-1, keepdims=True)                       # (T, 1)
    out = jnp.dot(p, v, preferred_element_type=jnp.float32)          # (T, HP)
    o_ref[0] = (out / denom).astype(o_ref.dtype)


def fuse_qkv_weights(wk, wq, wv, lane=LANE):
    """Build the fused, lane-padded QKV weight ONCE at parameter-init time.

    wk/wq/wv: (C, H). Returns (C, 3*HP) with HP = H rounded up to a multiple of
    `lane`; padded columns are zero so padded output lanes are exactly zero.
    """
    H = wk.shape[1]
    HP = ((H + lane - 1) // lane) * lane
    pad = ((0, 0), (0, HP - H))
    return jnp.concatenate(
        [jnp.pad(wk, pad), jnp.pad(wq, pad), jnp.pad(wv, pad)], axis=1)


@functools.partial(jax.jit, static_argnames=("head_size",))
def self_attention(x, w_fused, head_size):
    """x: (B, T, C) f32; w_fused: (C, 3*HP) from fuse_qkv_weights. -> (B, T, head_size)."""
    B, T, C = x.shape
    HP = w_fused.shape[1] // 3

    out_padded = pl.pallas_call(
        _self_attention_kernel,
        out_shape=jax.ShapeDtypeStruct((B, T, HP), x.dtype),
        grid_spec=pltpu.PrefetchScalarGridSpec(
            num_scalar_prefetch=0,
            grid=(B,),   # one batch element per step; B >= 2 steps -> both v7x TCs busy
            in_specs=[
                pl.BlockSpec((1, T, C), lambda b: (b, 0, 0)),
                pl.BlockSpec((C, 3 * HP), lambda b: (0, 0)),   # weights resident
            ],
            out_specs=pl.BlockSpec((1, T, HP), lambda b: (b, 0, 0)),
        ),
        compiler_params=pltpu.CompilerParams(
            dimension_semantics=("parallel",)),
    )(x, w_fused)

    # Drop the zero padding lanes (fused into the jitted graph, no extra dispatch).
    return out_padded[:, :, :head_size]


def _reference(x, wk, wq, wv):
    B, T, C = x.shape
    k = x @ wk
    q = x @ wq
    v = x @ wv
    wei = jnp.einsum("btd,bsd->bts", q, k) * (C ** -0.5)
    mask = jnp.tril(jnp.ones((T, T), dtype=bool))
    wei = jnp.where(mask, wei, -jnp.inf)
    wei = jax.nn.softmax(wei, axis=-1)
    return jnp.einsum("bts,bsd->btd", wei, v)


if __name__ == "__main__":
    head_size = 16
    B, T, C = 2, block_size, n_embd   # (2, 8, 32)

    key = jax.random.PRNGKey(0)
    kx, kk, kq, kv = jax.random.split(key, 4)

    x = jax.random.normal(kx, (B, T, C), dtype=jnp.float32)
    # deterministic "nn.Linear(bias=False)"-style weights, stored as (C, H)
    scale = 1.0 / jnp.sqrt(jnp.float32(C))
    wk = jax.random.uniform(kk, (C, head_size), jnp.float32, -scale, scale)
    wq = jax.random.uniform(kq, (C, head_size), jnp.float32, -scale, scale)
    wv = jax.random.uniform(kv, (C, head_size), jnp.float32, -scale, scale)

    # Parameter-init-time fusion (NOT in the per-call hot path).
    w_fused = jax.block_until_ready(fuse_qkv_weights(wk, wq, wv))

    out = jax.block_until_ready(self_attention(x, w_fused, head_size))
    ref = _reference(x, wk, wq, wv)

    assert out.shape == (B, T, head_size)
    # Exact divide in the softmax normalization -> tight f32 tolerance.
    assert jnp.allclose(out, ref, atol=1e-4, rtol=1e-4), "mismatch vs reference"

    print("KERNEL_OK")
</pallas_src>

<mosaic_0001>
module attributes {stable_mosaic.version = 11 : i64} {
  func.func @_self_attention_kernel(%arg0: i32, %arg1: memref<1x8x32xf32, #tpu.memory_space<vmem>>, %arg2: memref<32x384xf32, #tpu.memory_space<vmem>>, %arg3: memref<1x8x128xf32, #tpu.memory_space<vmem>>) attributes {dimension_semantics = [#tpu.dimension_semantics<parallel>], iteration_bounds = array<i64: 2>, scalar_prefetch = 0 : i64, scratch_operands = 0 : i64, tpu.core_type = #tpu.core_type<tc>, window_params = [{transform_indices = @transform_0, window_bounds = array<i64: 1, 8, 32>}, {pipeline_mode = #tpu.pipeline_mode<synchronous>, transform_indices = @transform_1, window_bounds = array<i64: 32, 384>}, {transform_indices = @transform_2, window_bounds = array<i64: 1, 8, 128>}]} {
    %c0 = arith.constant 0 : index
    %c0_0 = arith.constant 0 : index
    %c0_1 = arith.constant 0 : index
    %0 = vector.load %arg1[%c0, %c0_0, %c0_1] : memref<1x8x32xf32, #tpu.memory_space<vmem>>, vector<1x8x32xf32>
    %1 = vector.shape_cast %0 : vector<1x8x32xf32> to vector<8x32xf32>
    %c0_2 = arith.constant 0 : index
    %c0_3 = arith.constant 0 : index
    %2 = vector.load %arg2[%c0_2, %c0_3] : memref<32x384xf32, #tpu.memory_space<vmem>>, vector<32x384xf32>
    %cst = arith.constant dense<0.000000e+00> : vector<8x384xf32>
    %3 = tpu.matmul %1, %2, %cst {dimension_numbers = #tpu.dot_dimension_numbers<[1], [0], [0], [1], [0, 0, 1, 1], [], []>} : vector<8x32xf32>, vector<32x384xf32>, vector<8x384xf32> -> vector<8x384xf32>
    %4 = vector.extract_strided_slice %3 {offsets = [0, 0], sizes = [8, 128], strides = [1, 1]} : vector<8x384xf32> to vector<8x128xf32>
    %5 = vector.extract_strided_slice %3 {offsets = [0, 128], sizes = [8, 128], strides = [1, 1]} : vector<8x384xf32> to vector<8x128xf32>
    %cst_4 = arith.constant 0.176776692 : f32
    %6 = vector.broadcast %cst_4 : f32 to vector<8x128xf32>
    %7 = arith.mulf %5, %6 : vector<8x128xf32>
    %8 = vector.extract_strided_slice %3 {offsets = [0, 256], sizes = [8, 128], strides = [1, 1]} : vector<8x384xf32> to vector<8x128xf32>
    %cst_5 = arith.constant dense<0.000000e+00> : vector<8x8xf32>
    %9 = tpu.matmul %7, %4, %cst_5 {dimension_numbers = #tpu.dot_dimension_numbers<[1], [1], [0], [0], [0, 0, 1, 0], [], []>} : vector<8x128xf32>, vector<8x128xf32>, vector<8x8xf32> -> vector<8x8xf32>
    %10 = tpu.iota {dimensions = array<i32: 0>} : vector<8x8xi32>
    %11 = tpu.iota {dimensions = array<i32: 1>} : vector<8x8xi32>
    %12 = arith.cmpi sle, %11, %10 : vector<8x8xi32>
    %cst_6 = arith.constant 0xFF800000 : f32
    %13 = vector.broadcast %cst_6 : f32 to vector<8x8xf32>
    %14 = arith.select %12, %9, %13 : vector<8x8xi1>, vector<8x8xf32>
    %cst_7 = arith.constant dense<0xFF800000> : vector<8xf32>
    %15 = vector.multi_reduction <maximumf>, %14, %cst_7 [1] : vector<8x8xf32> to vector<8xf32>
    %16 = vector.shape_cast %15 : vector<8xf32> to vector<8x1xf32>
    %17 = vector.broadcast %16 : vector<8x1xf32> to vector<8x8xf32>
    %18 = arith.subf %14, %17 : vector<8x8xf32>
    %19 = math.exp %18 : vector<8x8xf32>
    %cst_8 = arith.constant dense<0.000000e+00> : vector<8xf32>
    %20 = vector.multi_reduction <add>, %19, %cst_8 [1] : vector<8x8xf32> to vector<8xf32>
    %21 = vector.shape_cast %20 : vector<8xf32> to vector<8x1xf32>
    %cst_9 = arith.constant dense<0.000000e+00> : vector<8x128xf32>
    %22 = tpu.matmul %19, %8, %cst_9 {dimension_numbers = #tpu.dot_dimension_numbers<[1], [0], [0], [1], [0, 0, 1, 1], [], []>} : vector<8x8xf32>, vector<8x128xf32>, vector<8x128xf32> -> vector<8x128xf32>
    %23 = vector.broadcast %21 : vector<8x1xf32> to vector<8x128xf32>
    %24 = arith.divf %22, %23 : vector<8x128xf32>
    %c0_10 = arith.constant 0 : index
    %c0_11 = arith.constant 0 : index
    %c0_12 = arith.constant 0 : index
    %25 = vector.load %arg3[%c0_10, %c0_11, %c0_12] : memref<1x8x128xf32, #tpu.memory_space<vmem>>, vector<1x8x128xf32>
    %26 = vector.shape_cast %25 : vector<1x8x128xf32> to vector<8x128xf32>
    %27 = vector.shape_cast %24 : vector<8x128xf32> to vector<1x8x128xf32>
    tpu.vector_store %arg3[%c0_10, %c0_11, %c0_12], %27 {strides = array<i32>} : memref<1x8x128xf32, #tpu.memory_space<vmem>>, vector<1x8x128xf32>,
    return
  }
  func.func @transform_0(%arg0: i32) -> (i32, i32, i32) {
    %c0_i32 = arith.constant 0 : i32
    %c0_i32_0 = arith.constant 0 : i32
    %c0_i32_1 = arith.constant 0 : i32
    return %arg0, %c0_i32, %c0_i32_0 : i32, i32, i32
  }
  func.func @transform_1(%arg0: i32) -> (i32, i32) {
    %c0_i32 = arith.constant 0 : i32
    %c0_i32_0 = arith.constant 0 : i32
    %c0_i32_1 = arith.constant 0 : i32
    return %c0_i32, %c0_i32_0 : i32, i32
  }
  func.func @transform_2(%arg0: i32) -> (i32, i32, i32) {
    %c0_i32 = arith.constant 0 : i32
    %c0_i32_0 = arith.constant 0 : i32
    %c0_i32_1 = arith.constant 0 : i32
    return %arg0, %c0_i32, %c0_i32_0 : i32, i32, i32
  }
}

</mosaic_0001>

<llo_original>
// kernel: self_attention.1
$region0: #{self_attention.1}
  #allocation0 [shape = 'u32[]', space=smem, size = 0x4, offset = 0x4, fixed_abs, tag = 'smem constant byte address 0x4 - core index']
  #allocation1 [shape = 'u32[144,128]{1,0:T(1,128)}', space=vmem, size = 0x12000, scoped, tag = 'internal scratch']
  %s0 = inlined_call_operand.hbm [shape: f32[2,8,32], index: 0, kind: input, shape index: {}]
  %s1 = inlined_call_operand.hbm [shape: f32[32,384], index: 1, kind: input, shape index: {}]
  %s2 = inlined_call_operand.hbm [shape: f32[2,8,128], index: 2, kind: output, shape index: {}]
  %s3 = sld [smem:[#allocation0]]
  $region49: #{self_attention.1} parent=0
    _
  %s5 = ssub.s32 1, %s3
  %s6 = scalar_select 0, %s5, %s3
  $region1: #{self_attention.1} parent=0
    #allocation2 [shape = 'u8[8192]{0}', space=vmem, size = 0x2000, scoped, tag = 'input window, operand 0']
    #allocation3 [shape = 's32[2]{0}', space=sflag, size = 0x8, scoped, tag = 'scoped memory for self_attention.1']
    #allocation4 [shape = 's32[2]{0}', space=sflag, size = 0x8, scoped, tag = 'scoped memory for self_attention.1']
    #allocation5 [shape = 'u8[49152]{0}', space=vmem, size = 0xc000, scoped, tag = 'input window, operand 1, single buffered']
    #allocation6 [shape = 's32[1]{0}', space=sflag, size = 0x4, scoped, tag = 'scoped memory for self_attention.1']
    #allocation7 [shape = 'u8[8192]{0}', space=vmem, size = 0x2000, scoped, tag = 'output window, operand 0']
    %7 = vsyncpa [#allocation3], 0
    %s8 = scalar_lea.sflag [#allocation3], 1
    %9 = vsyncpa %s8, 0
    %10 = vsyncpa [#allocation6], 0
    %11 = vsyncpa [#allocation4], 0
    %s12 = scalar_lea.sflag [#allocation4], 1
    %13 = vsyncpa %s12, 0
    loop: start=0, step=1, limit=4
    $region2: #{self_attention.1} parent=1 // loop_pre_header
      _
    $region3: #{self_attention.1} parent=1 // loop_header
      %s15 = sphi 0, %s19
      %p16 = scmp.ge.s32.totalorder %s15, 4
      %s25 = sphi 0, %s27
      %s28 = sphi 0, %s25
      %s29 = sphi 0, %s28
      %s45 = sphi 0, %s29
      %s49 = sphi 0, %s49
      %s51 = sphi 0, %s49
      %s52 = sphi 0, %s51
      %s66 = sphi 0, %s52
      %s72 = sphi 0, %s74
      %s75 = sphi 0, %s72
      %s76 = sphi 0, %s75
      %s92 = sphi 0, %s76
    $region4: #{self_attention.1} parent=1 // loop_header_branch
      %18 = sbr.rel (%p16) target = $region8
    $region5: #{self_attention.1} parent=1 // loop_body
      %s20 = ssub.s32 %s15, 1
      %s21 = ssub.s32 %s15, 2
      %s22 = sadd.s32 %s15, 1
      %s23 = ssub.s32 %s15, %s22
      %p24 = scmp.eq.s32.totalorder %s23, 0
      %s26 = sadd.s32 %s25, 1
      %s27 = scalar_select %p24, %s25, %s26
      %p30 = pneg %p24
      %p31 = scmp.eq.s32.totalorder %s15, 1
      %p32 = por %p30, %p31
      %p33 = scmp.ne.s32.totalorder %s25, %s28
      %p34 = scmp.eq.s32.totalorder %s15, 0
      %p35 = por %p33, %p34
      %p36 = scmp.ne.s32.totalorder %s25, %s28
      %p37 = scmp.eq.s32.totalorder %s20, 1
      %p38 = por %p36, %p37
      %p39 = scmp.ne.s32.totalorder %s28, %s29
      %p40 = scmp.eq.s32.totalorder %s20, 0
      %p41 = por %p39, %p40
      %p42 = scmp.ne.s32.totalorder %s28, %s29
      %p43 = scmp.eq.s32.totalorder %s21, 1
      %p44 = por %p42, %p43
      %p46 = scmp.ne.s32.totalorder %s29, %s45
      %p47 = scmp.eq.s32.totalorder %s21, 0
      %p48 = por %p46, %p47
      %s50 = sadd.s32 %s49, 1
      %p53 = scmp.eq.s32.totalorder %s15, 1
      %p54 = scmp.ne.s32.totalorder %s49, %s51
      %p55 = scmp.eq.s32.totalorder %s15, 0
      %p56 = por %p54, %p55
      %p57 = scmp.ne.s32.totalorder %s49, %s51
      %p58 = scmp.eq.s32.totalorder %s20, 1
      %p59 = por %p57, %p58
      %p60 = scmp.ne.s32.totalorder %s51, %s52
      %p61 = scmp.eq.s32.totalorder %s20, 0
      %p62 = por %p60, %p61
      %p63 = scmp.ne.s32.totalorder %s51, %s52
      %p64 = scmp.eq.s32.totalorder %s21, 1
      %p65 = por %p63, %p64
      %p67 = scmp.ne.s32.totalorder %s52, %s66
      %p68 = scmp.eq.s32.totalorder %s21, 0
      %p69 = por %p67, %p68
      %s70 = ssub.s32 %s15, %s22
      %p71 = scmp.eq.s32.totalorder %s70, 0
      %s73 = sadd.s32 %s72, 1
      %s74 = scalar_select %p71, %s72, %s73
      %p77 = pneg %p71
      %p78 = scmp.eq.s32.totalorder %s15, 1
      %p79 = por %p77, %p78
      %p80 = scmp.ne.s32.totalorder %s72, %s75
      %p81 = scmp.eq.s32.totalorder %s15, 0
      %p82 = por %p80, %p81
      %p83 = scmp.ne.s32.totalorder %s72, %s75
      %p84 = scmp.eq.s32.totalorder %s20, 1
      %p85 = por %p83, %p84
      %p86 = scmp.ne.s32.totalorder %s75, %s76
      %p87 = scmp.eq.s32.totalorder %s20, 0
      %p88 = por %p86, %p87
      %p89 = scmp.ne.s32.totalorder %s75, %s76
      %p90 = scmp.eq.s32.totalorder %s21, 1
      %p91 = por %p89, %p90
      %p93 = scmp.ne.s32.totalorder %s76, %s92
      %p94 = scmp.eq.s32.totalorder %s21, 0
      %p95 = por %p93, %p94
      %p96 = scmp.le.s32.totalorder 1, %s15
      %p97 = scmp.lt.s32.totalorder %s15, 3
      %p98 = pnand %p96, %p97
      %p99 = pneg %p98
      // Predicated region
      $region9: #{self_attention.1} parent=5 // pred_check
        _
      $region10: #{self_attention.1} parent=5 // pred_check_branch
        %101 = sbr.rel (%p98) target = $region12
      $region11: #{self_attention.1} parent=5 // pred_region
        %s102 = ssub.s32 %s15, 1
        // Predicated region
        $region13: #{self_attention.1} parent=11 // pred_check
          %p103 = pneg %p62
        $region14: #{self_attention.1} parent=11 // pred_check_branch
          %105 = sbr.rel (%p103) target = $region16
        $region15: #{self_attention.1} parent=11 // pred_region
          %s107 = ssub.s32 1536, 1536
          %108 = vsyncadd [#allocation6], %s107
          %s109 = sshll.u32 [#allocation5], 4
          %s110 = int_to_ptr.vmem [resolvable:$true] %s109
          %115 = dma.hbm_to_vmem [thread:$0]  %s1, 1536, %s110, [#allocation6], 384, 384, 24
        $region16: #{self_attention.1} parent=11 // pred_fallthru
          _
      $region12: #{self_attention.1} parent=5 // pred_fallthru
        _
      %p116 = scmp.lt.s32.totalorder %s15, 2
      // Predicated region
      $region17: #{self_attention.1} parent=5 // pred_check
        %p117 = pneg %p116
      $region18: #{self_attention.1} parent=5 // pred_check_branch
        %119 = sbr.rel (%p117) target = $region20
      $region19: #{self_attention.1} parent=5 // pred_region
        // Predicated region
        $region21: #{self_attention.1} parent=19 // pred_check
          %p120 = pneg %p35
        $region22: #{self_attention.1} parent=19 // pred_check_branch
          %122 = sbr.rel (%p120) target = $region24
        $region23: #{self_attention.1} parent=19 // pred_region
          %s123 = sand.u32 %s25, 1
          %s124 = scalar_lea.sflag [#allocation3], %s123
          %s125 = sand.u32 %s25, 1
          %s126 = smul.addr %s125, 8
          %s127 = scalar_lea.vmem [#allocation2], %s126
          %s129 = ssub.s32 128, 128
          %130 = vsyncadd %s124, %s129
          %s131 = smul.addr %s15, 128
          %s132 = scalar_lea.hbm %s0, %s131
          %s134 = sshll.u32 %s127, 4
          %s135 = int_to_ptr.vmem [resolvable:$true] %s134
          %137 = dma.hbm_to_vmem [thread:$0]  %s132, 128, %s135, %s124
        $region24: #{self_attention.1} parent=19 // pred_fallthru
          _
      $region20: #{self_attention.1} parent=5 // pred_fallthru
        _
      %p138 = scmp.le.s32.totalorder 1, %s15
      %p139 = scmp.lt.s32.totalorder %s15, 3
      %p140 = pnand %p138, %p139
      %p141 = pneg %p140
      // Predicated region
      $region25: #{self_attention.1} parent=5 // pred_check
        _
      $region26: #{self_attention.1} parent=5 // pred_check_branch
        %143 = sbr.rel (%p140) target = $region28
      $region27: #{self_attention.1} parent=5 // pred_region
        %s144 = ssub.s32 %s15, 1
        %s145 = sand.u32 %s28, 1
        %s146 = scalar_lea.sflag [#allocation3], %s145
        %s147 = sand.u32 %s28, 1
        %s148 = smul.addr %s147, 8
        %s149 = scalar_lea.vmem [#allocation2], %s148
        // Predicated region
        $region29: #{self_attention.1} parent=27 // pred_check
          %p150 = pneg %p41
        $region30: #{self_attention.1} parent=27 // pred_check_branch
          %152 = sbr.rel (%p150) target = $region32
        $region31: #{self_attention.1} parent=27 // pred_region
          %153 = dma.done %s146, 128
        $region32: #{self_attention.1} parent=27 // pred_fallthru
          _
        // Predicated region
        $region33: #{self_attention.1} parent=27 // pred_check
          %p154 = pneg %p62
        $region34: #{self_attention.1} parent=27 // pred_check_branch
          %156 = sbr.rel (%p154) target = $region36
        $region35: #{self_attention.1} parent=27 // pred_region
          %157 = dma.done [#allocation6], 1536
        $region36: #{self_attention.1} parent=27 // pred_fallthru
          _
        %s158 = sand.u32 %s28, 1
        %s159 = scalar_lea.sflag [#allocation3], %s158
        %s160 = sand.u32 %s28, 1
        %s161 = smul.addr %s160, 8
        %s162 = scalar_lea.vmem [#allocation2], %s161
        %p163 = pneg %p41
        %p164 = pneg %p38
        %p165 = pneg %p62
        %p166 = pneg %p59
        %p167 = pneg %p88
        %p168 = pneg %p85
        %s169 = sand.u32 %s75, 1
        %s170 = scalar_lea.sflag [#allocation4], %s169
        %s171 = sand.u32 %s75, 1
        %s172 = smul.addr %s171, 8
        %s173 = scalar_lea.vmem [#allocation7], %s172
        %v174 = vld [vmem:[%s149] sm:$0xff]
        %v175 = vld [vmem:[#allocation5] sm:$0xff]
        %v176 = vld [vmem:[#allocation5 + $0x8] sm:$0xff]
        %v177 = vld [vmem:[#allocation5 + $0x10] sm:$0xff]
        %v178 = vld [vmem:[#allocation5 + $0x18] sm:$0xff]
        %v179 = vld [vmem:[#allocation5 + $0x20] sm:$0xff]
        %v180 = vld [vmem:[#allocation5 + $0x28] sm:$0xff]
        %v181 = vld [vmem:[#allocation5 + $0x30] sm:$0xff]
        %v182 = vld [vmem:[#allocation5 + $0x38] sm:$0xff]
        %v183 = vld [vmem:[#allocation5 + $0x40] sm:$0xff]
        %v184 = vld [vmem:[#allocation5 + $0x48] sm:$0xff]
        %v185 = vld [vmem:[#allocation5 + $0x50] sm:$0xff]
        %v186 = vld [vmem:[#allocation5 + $0x58] sm:$0xff]
        %vm187 = vcmask 261120
        %v189 = vsel %vm187, %v174, 0
        %191 = vmatprep.subr.mxu0 %v176
        %192 = vmatpush1.msra.mxu0 %v175
        %193 = vmatprep.subr.mxu0 %v179
        %194 = vmatpush1.msra.mxu0 %v178
        %195 = vmatprep.subr.mxu0 %v182
        %196 = vmatpush1.msra.mxu0 %v181
        %197 = vmatprep.subr.mxu0 %v185
        %198 = vmatpush1.msra.mxu0 %v184
        %199 = vmatprep.subr.mxu0 0.0
        %200 = vmatpush1.msra.mxu0 0.0
        %201 = vmatprep.subr.mxu0 0.0
        %202 = vmatpush1.msra.mxu0 0.0
        %203 = vmatprep.subr.mxu0 0.0
        %204 = vmatpush1.msra.mxu0 0.0
        %205 = vmatprep.subr.mxu0 0.0
        %206 = vmatpush1.msra.mxu0 0.0
        %207 = vmatprep.subr.mxu0 0.0
        %208 = vmatpush1.msra.mxu0 0.0
        %209 = vmatprep.subr.mxu0 0.0
        %210 = vmatpush1.msra.mxu0 0.0
        %211 = vmatprep.subr.mxu0 0.0
        %212 = vmatpush1.msra.mxu0 0.0
        %213 = vmatprep.subr.mxu0 0.0
        %214 = vmatpush1.msra.mxu0 0.0
        %215 = vmatprep.subr.mxu0 0.0
        %216 = vmatpush1.msra.mxu0 0.0
        %217 = vmatprep.subr.mxu0 0.0
        %218 = vmatpush1.msra.mxu0 0.0
        %219 = vmatprep.subr.mxu0 0.0
        %220 = vmatpush1.msra.mxu0 0.0
        %221 = vmatprep.subr.mxu0 0.0
        %222 = vmatpush1.msra.mxu0 0.0
        %223 = vmatprep.subr.mxu0 0.0
        %224 = vmatpush1.msra.mxu0 0.0
        %225 = vmatprep.subr.mxu0 0.0
        %226 = vmatpush1.msra.mxu0 0.0
        %227 = vmatprep.subr.mxu0 0.0
        %228 = vmatpush1.msra.mxu0 0.0
        %229 = vmatprep.subr.mxu0 0.0
        %230 = vmatpush1.msra.mxu0 0.0
        %231 = vmatprep.subr.mxu0 0.0
        %232 = vmatpush1.msra.mxu0 0.0
        %233 = vmatprep.subr.mxu0 0.0
        %234 = vmatpush1.msra.mxu0 0.0
        %235 = vmatprep.subr.mxu0 0.0
        %236 = vmatpush1.msra.mxu0 0.0
        %237 = vmatprep.subr.mxu0 0.0
        %238 = vmatpush1.msra.mxu0 0.0
        %239 = vmatprep.subr.mxu0 0.0
        %240 = vmatpush1.msra.mxu0 0.0
        %241 = vmatprep.subr.mxu0 0.0
        %242 = vmatpush1.msra.mxu0 0.0
        %243 = vmatprep.subr.mxu0 0.0
        %244 = vmatpush1.msra.mxu0 0.0
        %245 = vmatprep.subr.mxu0 0.0
        %246 = vmatpush1.msra.mxu0 0.0
        %247 = vmatprep.subr.mxu0 0.0
        %248 = vmatpush1.msra.mxu0 0.0
        %249 = vmatprep.subr.mxu0 0.0
        %250 = vmatpush1.msra.mxu0 0.0
        %251 = vmatprep.subr.mxu0 0.0
        %252 = vmatpush1.msra.mxu0 0.0
        %253 = vmatprep.subr.mxu0 0.0
        %254 = vmatpush1.msra.mxu0 0.0
        %255 = vmatprep.mubr.f32.mxu0 0.0
        %256 = vmatmul.mubr.f32.gmra.mrb[0].mxu0 %v189
        %v257 = vpop.f32.mrb[0].mxu0
        %v258 = vadd.f32 0.0, %v257
        %v259 = vpop.f32.mrb[0].mxu0
        %v260 = vadd.f32 0.0, %v259
        %261 = vdwg.mxu0
        %262 = vmatprep.subr.mxu0 0.0
        %263 = vmatpush1.msra.mxu0 %v177
        %264 = vmatprep.subr.mxu0 0.0
        %265 = vmatpush1.msra.mxu0 %v180
        %266 = vmatprep.subr.mxu0 0.0
        %267 = vmatpush1.msra.mxu0 %v183
        %268 = vmatprep.subr.mxu0 0.0
        %269 = vmatpush1.msra.mxu0 %v186
        %270 = vmatprep.subr.mxu0 0.0
        %271 = vmatpush1.msra.mxu0 0.0
        %272 = vmatprep.subr.mxu0 0.0
        %273 = vmatpush1.msra.mxu0 0.0
        %274 = vmatprep.subr.mxu0 0.0
        %275 = vmatpush1.msra.mxu0 0.0
        %276 = vmatprep.subr.mxu0 0.0
        %277 = vmatpush1.msra.mxu0 0.0
        %278 = vmatprep.subr.mxu0 0.0
        %279 = vmatpush1.msra.mxu0 0.0
        %280 = vmatprep.subr.mxu0 0.0
        %281 = vmatpush1.msra.mxu0 0.0
        %282 = vmatprep.subr.mxu0 0.0
        %283 = vmatpush1.msra.mxu0 0.0
        %284 = vmatprep.subr.mxu0 0.0
        %285 = vmatpush1.msra.mxu0 0.0
        %286 = vmatprep.subr.mxu0 0.0
        %287 = vmatpush1.msra.mxu0 0.0
        %288 = vmatprep.subr.mxu0 0.0
        %289 = vmatpush1.msra.mxu0 0.0
        %290 = vmatprep.subr.mxu0 0.0
        %291 = vmatpush1.msra.mxu0 0.0
        %292 = vmatprep.subr.mxu0 0.0
        %293 = vmatpush1.msra.mxu0 0.0
        %294 = vmatprep.subr.mxu0 0.0
        %295 = vmatpush1.msra.mxu0 0.0
        %296 = vmatprep.subr.mxu0 0.0
        %297 = vmatpush1.msra.mxu0 0.0
        %298 = vmatprep.subr.mxu0 0.0
        %299 = vmatpush1.msra.mxu0 0.0
        %300 = vmatprep.subr.mxu0 0.0
        %301 = vmatpush1.msra.mxu0 0.0
        %302 = vmatprep.subr.mxu0 0.0
        %303 = vmatpush1.msra.mxu0 0.0
        %304 = vmatprep.subr.mxu0 0.0
        %305 = vmatpush1.msra.mxu0 0.0
        %306 = vmatprep.subr.mxu0 0.0
        %307 = vmatpush1.msra.mxu0 0.0
        %308 = vmatprep.subr.mxu0 0.0
        %309 = vmatpush1.msra.mxu0 0.0
        %310 = vmatprep.subr.mxu0 0.0
        %311 = vmatpush1.msra.mxu0 0.0
        %312 = vmatprep.subr.mxu0 0.0
        %313 = vmatpush1.msra.mxu0 0.0
        %314 = vmatprep.subr.mxu0 0.0
        %315 = vmatpush1.msra.mxu0 0.0
        %316 = vmatprep.subr.mxu0 0.0
        %317 = vmatpush1.msra.mxu0 0.0
        %318 = vmatprep.subr.mxu0 0.0
        %319 = vmatpush1.msra.mxu0 0.0
        %320 = vmatprep.subr.mxu0 0.0
        %321 = vmatpush1.msra.mxu0 0.0
        %322 = vmatprep.subr.mxu0 0.0
        %323 = vmatpush1.msra.mxu0 0.0
        %324 = vmatprep.subr.mxu0 0.0
        %325 = vmatpush1.msra.mxu0 0.0
        %326 = vmatprep.mubr.f32.mxu0 0.0
        %327 = vmatmul.mubr.f32.gmra.mrb[0].mxu0 %v189
        %v328 = vpop.f32.mrb[0].mxu0
        %v329 = vadd.f32 0.0, %v328
        %v330 = vpop.f32.mrb[0].mxu0
        %331 = vdwg.mxu0
        %v332 = vmul.f32 %v260, 0.17677669
        %333 = vmatprep.subr.mxu0 0.0
        %334 = vmatpush1.xpose.msra.mxu0 %v258
        %335 = vmatprep.subr.mxu0 0.0
        %336 = vmatpush1.xpose.msra.mxu0 0.0
        %337 = vmatprep.subr.mxu0 0.0
        %338 = vmatpush1.xpose.msra.mxu0 0.0
        %339 = vmatprep.subr.mxu0 0.0
        %340 = vmatpush1.xpose.msra.mxu0 0.0
        %341 = vmatprep.subr.mxu0 0.0
        %342 = vmatpush1.xpose.msra.mxu0 0.0
        %343 = vmatprep.subr.mxu0 0.0
        %344 = vmatpush1.xpose.msra.mxu0 0.0
        %345 = vmatprep.subr.mxu0 0.0
        %346 = vmatpush1.xpose.msra.mxu0 0.0
        %347 = vmatprep.subr.mxu0 0.0
        %348 = vmatpush1.xpose.msra.mxu0 0.0
        %349 = vmatprep.subr.mxu0 0.0
        %350 = vmatpush1.xpose.msra.mxu0 0.0
        %351 = vmatprep.subr.mxu0 0.0
        %352 = vmatpush1.xpose.msra.mxu0 0.0
        %353 = vmatprep.subr.mxu0 0.0
        %354 = vmatpush1.xpose.msra.mxu0 0.0
        %355 = vmatprep.subr.mxu0 0.0
        %356 = vmatpush1.xpose.msra.mxu0 0.0
        %357 = vmatprep.subr.mxu0 0.0
        %358 = vmatpush1.xpose.msra.mxu0 0.0
        %359 = vmatprep.subr.mxu0 0.0
        %360 = vmatpush1.xpose.msra.mxu0 0.0
        %361 = vmatprep.subr.mxu0 0.0
        %362 = vmatpush1.xpose.msra.mxu0 0.0
        %363 = vmatprep.subr.mxu0 0.0
        %364 = vmatpush1.xpose.msra.mxu0 0.0
        %365 = vmatprep.subr.mxu0 0.0
        %366 = vmatpush1.xpose.msra.mxu0 0.0
        %367 = vmatprep.subr.mxu0 0.0
        %368 = vmatpush1.xpose.msra.mxu0 0.0
        %369 = vmatprep.subr.mxu0 0.0
        %370 = vmatpush1.xpose.msra.mxu0 0.0
        %371 = vmatprep.subr.mxu0 0.0
        %372 = vmatpush1.xpose.msra.mxu0 0.0
        %373 = vmatprep.subr.mxu0 0.0
        %374 = vmatpush1.xpose.msra.mxu0 0.0
        %375 = vmatprep.subr.mxu0 0.0
        %376 = vmatpush1.xpose.msra.mxu0 0.0
        %377 = vmatprep.subr.mxu0 0.0
        %378 = vmatpush1.xpose.msra.mxu0 0.0
        %379 = vmatprep.subr.mxu0 0.0
        %380 = vmatpush1.xpose.msra.mxu0 0.0
        %381 = vmatprep.subr.mxu0 0.0
        %382 = vmatpush1.xpose.msra.mxu0 0.0
        %383 = vmatprep.subr.mxu0 0.0
        %384 = vmatpush1.xpose.msra.mxu0 0.0
        %385 = vmatprep.subr.mxu0 0.0
        %386 = vmatpush1.xpose.msra.mxu0 0.0
        %387 = vmatprep.subr.mxu0 0.0
        %388 = vmatpush1.xpose.msra.mxu0 0.0
        %389 = vmatprep.subr.mxu0 0.0
        %390 = vmatpush1.xpose.msra.mxu0 0.0
        %391 = vmatprep.subr.mxu0 0.0
        %392 = vmatpush1.xpose.msra.mxu0 0.0
        %393 = vmatprep.subr.mxu0 0.0
        %394 = vmatpush1.xpose.msra.mxu0 0.0
        %395 = vmatprep.subr.mxu0 0.0
        %396 = vmatpush1.xpose.msra.mxu0 0.0
        %397 = vmatprep.mubr.f32.mxu0 0.0
        %398 = vmatmul.mubr.f32.gmra.mrb[0].mxu0 %v332
        %v399 = vpop.f32.mrb[0].mxu0
        %v400 = vadd.f32 0.0, %v399
        %v401 = vpop.f32.mrb[0].mxu0
        %402 = vdwg.mxu0
        %v403 = vlaneseq
        %v404 = vshrl.u32 %v403, 7
        %v405 = vlaneseq
        %v406 = vand.u32 %v405, 127
        %vm407 = vcmp.le.s32.totalorder %v406, %v404
        %v408 = vsel %vm407, %v400, -inf
        %vm409 = vcmask 64512
        %v410 = vsel %vm409, %v408, -inf
        %411 = vmax.xlane.f32.xlu0 %v410
        %v412 = vpop.xlane.xlu0 %411
        %v413 = vsub.f32 %v408, %v412
        %v414 = vmul.f32 %v413, 1.442695
        %v415 = vpow.pop %v414
        %v416 = vsel %vm409, %v415, 0.0
        %417 = vadd.xlane.f32.xlu0 %v416
        %v418 = vpop.xlane.xlu0 %417
        %v420 = vsel %vm409, %v415, 0
        %422 = vmatprep.subr.mxu0 0.0
        %423 = vmatpush1.msra.mxu0 %v329
        %424 = vmatprep.subr.mxu0 0.0
        %425 = vmatpush1.msra.mxu0 0.0
        %426 = vmatprep.subr.mxu0 0.0
        %427 = vmatpush1.msra.mxu0 0.0
        %428 = vmatprep.subr.mxu0 0.0
        %429 = vmatpush1.msra.mxu0 0.0
        %430 = vmatprep.subr.mxu0 0.0
        %431 = vmatpush1.msra.mxu0 0.0
        %432 = vmatprep.subr.mxu0 0.0
        %433 = vmatpush1.msra.mxu0 0.0
        %434 = vmatprep.subr.mxu0 0.0
        %435 = vmatpush1.msra.mxu0 0.0
        %436 = vmatprep.subr.mxu0 0.0
        %437 = vmatpush1.msra.mxu0 0.0
        %438 = vmatprep.subr.mxu0 0.0
        %439 = vmatpush1.msra.mxu0 0.0
        %440 = vmatprep.subr.mxu0 0.0
        %441 = vmatpush1.msra.mxu0 0.0
        %442 = vmatprep.subr.mxu0 0.0
        %443 = vmatpush1.msra.mxu0 0.0
        %444 = vmatprep.subr.mxu0 0.0
        %445 = vmatpush1.msra.mxu0 0.0
        %446 = vmatprep.subr.mxu0 0.0
        %447 = vmatpush1.msra.mxu0 0.0
        %448 = vmatprep.subr.mxu0 0.0
        %449 = vmatpush1.msra.mxu0 0.0
        %450 = vmatprep.subr.mxu0 0.0
        %451 = vmatpush1.msra.mxu0 0.0
        %452 = vmatprep.subr.mxu0 0.0
        %453 = vmatpush1.msra.mxu0 0.0
        %454 = vmatprep.subr.mxu0 0.0
        %455 = vmatpush1.msra.mxu0 0.0
        %456 = vmatprep.subr.mxu0 0.0
        %457 = vmatpush1.msra.mxu0 0.0
        %458 = vmatprep.subr.mxu0 0.0
        %459 = vmatpush1.msra.mxu0 0.0
        %460 = vmatprep.subr.mxu0 0.0
        %461 = vmatpush1.msra.mxu0 0.0
        %462 = vmatprep.subr.mxu0 0.0
        %463 = vmatpush1.msra.mxu0 0.0
        %464 = vmatprep.subr.mxu0 0.0
        %465 = vmatpush1.msra.mxu0 0.0
        %466 = vmatprep.subr.mxu0 0.0
        %467 = vmatpush1.msra.mxu0 0.0
        %468 = vmatprep.subr.mxu0 0.0
        %469 = vmatpush1.msra.mxu0 0.0
        %470 = vmatprep.subr.mxu0 0.0
        %471 = vmatpush1.msra.mxu0 0.0
        %472 = vmatprep.subr.mxu0 0.0
        %473 = vmatpush1.msra.mxu0 0.0
        %474 = vmatprep.subr.mxu0 0.0
        %475 = vmatpush1.msra.mxu0 0.0
        %476 = vmatprep.subr.mxu0 0.0
        %477 = vmatpush1.msra.mxu0 0.0
        %478 = vmatprep.subr.mxu0 0.0
        %479 = vmatpush1.msra.mxu0 0.0
        %480 = vmatprep.subr.mxu0 0.0
        %481 = vmatpush1.msra.mxu0 0.0
        %482 = vmatprep.subr.mxu0 0.0
        %483 = vmatpush1.msra.mxu0 0.0
        %484 = vmatprep.subr.mxu0 0.0
        %485 = vmatpush1.msra.mxu0 0.0
        %486 = vmatprep.mubr.f32.mxu0 0.0
        %487 = vmatmul.mubr.f32.gmra.mrb[0].mxu0 %v420
        %v488 = vpop.f32.mrb[0].mxu0
        %v489 = vadd.f32 0.0, %v488
        %v490 = vpop.f32.mrb[0].mxu0
        %491 = vdwg.mxu0
        %v492 = vrcp.pop %v418
        %v493 = vmul.f32 %v489, %v492
        %494 = vst [vmem:[%s173] sm:$0xff] %v493
        %s495 = sand.u32 %s75, 1
        %s496 = scalar_lea.sflag [#allocation4], %s495
        %s497 = sand.u32 %s75, 1
        %s498 = smul.addr %s497, 8
        %s499 = scalar_lea.vmem [#allocation7], %s498
        // Predicated region
        $region37: #{self_attention.1} parent=27 // pred_check
          %p500 = pneg %p85
        $region38: #{self_attention.1} parent=27 // pred_check_branch
          %502 = sbr.rel (%p500) target = $region40
        $region39: #{self_attention.1} parent=27 // pred_region
          %s504 = ssub.s32 128, 128
          %505 = vsyncadd %s496, %s504
          %s506 = smul.addr %s20, 128
          %s507 = scalar_lea.hbm %s2, %s506
          %s509 = sshll.u32 %s499, 4
          %s510 = int_to_ptr.vmem [resolvable:$true] %s509
          %512 = dma.vmem_to_hbm [thread:$0]  %s510, 128, %s507, %s496
        $region40: #{self_attention.1} parent=27 // pred_fallthru
          _
      $region28: #{self_attention.1} parent=5 // pred_fallthru
        _
      %p513 = scmp.le.s32.totalorder 2, %s15
      // Predicated region
      $region41: #{self_attention.1} parent=5 // pred_check
        %p514 = pneg %p513
      $region42: #{self_attention.1} parent=5 // pred_check_branch
        %516 = sbr.rel (%p514) target = $region44
      $region43: #{self_attention.1} parent=5 // pred_region
        %s517 = ssub.s32 %s15, 2
        // Predicated region
        $region45: #{self_attention.1} parent=43 // pred_check
          %p518 = pneg %p91
        $region46: #{self_attention.1} parent=43 // pred_check_branch
          %520 = sbr.rel (%p518) target = $region48
        $region47: #{self_attention.1} parent=43 // pred_region
          %s521 = sand.u32 %s76, 1
          %s522 = scalar_lea.sflag [#allocation4], %s521
          %s523 = sand.u32 %s76, 1
          %s524 = smul.addr %s523, 8
          %s525 = scalar_lea.vmem [#allocation7], %s524
          %526 = dma.done %s522, 128
        $region48: #{self_attention.1} parent=43 // pred_fallthru
          _
      $region44: #{self_attention.1} parent=5 // pred_fallthru
        _
    $region6: #{self_attention.1} parent=1 // loop_footer
      %s19 = sadd.s32 1, %s15
    $region7: #{self_attention.1} parent=1 // loop_footer_branch
      %14 = sbr.rel target = $region3
    $region8: #{self_attention.1} parent=1 // loop_exit
      _
    %527 = vsyncpa [#allocation3], 1
    %s528 = scalar_lea.sflag [#allocation3], 1
    %529 = vsyncpa %s528, 1
    %530 = vsyncpa [#allocation6], 1
    %531 = vsyncpa [#allocation4], 1
    %s532 = scalar_lea.sflag [#allocation4], 1
    %533 = vsyncpa %s532, 1

</llo_original>
